<compile_context>
chip_gen: v5e
topology: v5e:2x2
jax: 0.10.0
libtpu: 0.0.40
codegen_flags: <defaults>
</compile_context>

<pallas_src>
import jax
import jax.numpy as jnp
from jax.experimental import pallas as pl
from jax.experimental.pallas import tpu as pltpu

HIDDEN = 64     # true hidden width of the module
LANES = 128     # lane width; hidden padded 64 -> 128
ONE_COL = HIDDEN  # column 64 carries a constant 1.0 through both ReLUs (bias channel)


def _round_up(n, m):
    return (n + m - 1) // m * m


def pack_params(params, dtype=jnp.float32):
    """Pack all parameters into one zero-padded [rows, 128] f32 slab (call ONCE).

    Weights are stored transposed vs PyTorch, i.e. [in_features, out_features],
    so the kernel computes y = x @ W + b (== torch's x @ W.T + b).

    Slab layout (row offsets in meta):
      [0, in_rows)            W1  (in -> 64), cols >= 64 zero
      [w2_off, +128)          W2 block; row 64 = [b2 | 1.0 at col 64 | 0...]
      [w3t_off, +8)           W3^T block; row j<2 = [w3[:, j] | b3[j] at col 64 | 0...]
      [b1_off, +8)            row 0 = [b1 | 1.0 at col 64 | 0...]  (seeds ones channel)
    """
    w1 = jnp.asarray(params["w1"], dtype)   # [in, 64]
    b1 = jnp.asarray(params["b1"], dtype)   # [64]
    w2 = jnp.asarray(params["w2"], dtype)   # [64, 64]
    b2 = jnp.asarray(params["b2"], dtype)   # [64]
    w3 = jnp.asarray(params["w3"], dtype)   # [64, 2]
    b3 = jnp.asarray(params["b3"], dtype)   # [2]

    in_f, hid = w1.shape
    out_f = w3.shape[1]
    assert hid == HIDDEN and out_f <= 8
    in_rows = _round_up(in_f, 8)

    w1_blk = jnp.zeros((in_rows, LANES), dtype).at[:in_f, :hid].set(w1)
    w2_blk = (jnp.zeros((LANES, LANES), dtype)
              .at[:hid, :hid].set(w2)
              .at[ONE_COL, :hid].set(b2)       # b2 folded (picked up by ones channel)
              .at[ONE_COL, ONE_COL].set(1.0))  # propagate the 1 to h2
    w3t_blk = (jnp.zeros((8, LANES), dtype)
               .at[:out_f, :hid].set(w3.T)     # transposed last layer
               .at[:out_f, ONE_COL].set(b3))   # b3 folded
    b1_blk = (jnp.zeros((8, LANES), dtype)
              .at[0, :hid].set(b1)
              .at[0, ONE_COL].set(1.0))        # seed of the ones channel

    slab = jnp.concatenate([w1_blk, w2_blk, w3t_blk, b1_blk], axis=0)
    meta = dict(
        in_features=in_f,
        out_features=out_f,
        in_rows=in_rows,
        w2_off=in_rows,
        w3t_off=in_rows + LANES,
        b1_off=in_rows + LANES + 8,
        rows=in_rows + LANES + 16,
    )
    return slab, meta


def _make_kernel(meta):
    in_rows = meta["in_rows"]
    w2_off, w3t_off, b1_off = meta["w2_off"], meta["w3t_off"], meta["b1_off"]

    def kernel(x_ref, p_ref, ot_ref):
        x = x_ref[...]                                  # (tb, in_rows) f32
        w1 = p_ref[0:in_rows, :]                        # (in_rows, 128)
        w2 = p_ref[w2_off:w2_off + LANES, :]            # (128, 128)   b2 folded
        w3t = p_ref[w3t_off:w3t_off + 8, :]             # (8, 128)     b3 folded
        b1 = p_ref[b1_off:b1_off + 1, :]                # (1, 128)     b1 + ones seed

        # fc1[0]: Linear(in, 64) + ReLU; col 64 becomes the constant-1 channel
        h1 = jnp.maximum(
            jnp.dot(x, w1, preferred_element_type=jnp.float32) + b1, 0.0)
        # fc1[2]: Linear(64, 64) + ReLU (bias b2 rides in via h1[:, 64] == 1)
        h2 = jnp.maximum(
            jnp.dot(h1, w2, preferred_element_type=jnp.float32), 0.0)
        # fc2: Linear(64, 2), computed transposed: (8,128) . (tb,128)^T -> (8, tb)
        # so the output keeps the batch on the lane axis (lane-dense stores).
        ot_ref[...] = jax.lax.dot_general(
            w3t, h2, (((1,), (1,)), ((), ())),
            preferred_element_type=jnp.float32).astype(ot_ref.dtype)

    return kernel


def _pick_batch_tile(B, block_b):
    """Batch tile: multiple of 128 (batch is the output lane axis); shrink so the
    grid has >= 4 steps when possible (keeps both v7x TensorCores busy)."""
    tb = max(128, (min(block_b, _round_up(B, 128)) // 128) * 128)
    while tb > 128 and pl.cdiv(B, tb) < 4:
        tb = max(128, ((tb // 2) // 128) * 128)
    return tb


def dnn_forward(x, slab, meta, *, block_b=512):
    """x: [B, input_size] f32; slab/meta: from pack_params (pre-packed, reused)."""
    B, in_f = x.shape
    assert in_f == meta["in_features"], (in_f, meta["in_features"])
    in_rows = meta["in_rows"]

    xk = x.astype(slab.dtype)
    if in_f != in_rows:
        # Only for datasets whose input_size is not sublane-aligned; elec2 (8) skips this.
        xk = jnp.pad(xk, ((0, 0), (0, in_rows - in_f)))

    tb = _pick_batch_tile(B, block_b)
    grid = (pl.cdiv(B, tb),)   # ragged last tile handled by Pallas partial blocks

    out_t = pl.pallas_call(
        _make_kernel(meta),
        out_shape=jax.ShapeDtypeStruct((8, B), jnp.float32),   # batch on lanes
        grid=grid,
        in_specs=[
            # streaming operand: batch-tiled, double-buffered by the pipeline
            pl.BlockSpec((tb, in_rows), lambda i: (i, 0)),
            # packed parameter slab: constant block index -> DMA'd once, VMEM-resident
            pl.BlockSpec((meta["rows"], LANES), lambda i: (0, 0)),
        ],
        out_specs=pl.BlockSpec((8, tb), lambda i: (0, i)),
        compiler_params=pltpu.CompilerParams(
            dimension_semantics=("parallel",)),   # shard batch tiles across v7x TCs
    )(xk, slab)

    # Only rows [0, out_features) are live; (2, B) -> (B, 2) slice/transpose is tiny.
    return out_t[:meta["out_features"], :].T


def init_params(key, input_size=8, hidden=HIDDEN, output_size=2):
    """Deterministic synthetic init; weights stored as [in, out] (transposed vs torch)."""
    ks = jax.random.split(key, 6)

    def lin(kw, kb, fan_in, fan_out):
        bound = 1.0 / jnp.sqrt(jnp.asarray(fan_in, jnp.float32))
        w = jax.random.uniform(kw, (fan_in, fan_out), jnp.float32, -bound, bound)
        b = jax.random.uniform(kb, (fan_out,), jnp.float32, -bound, bound)
        return w, b

    w1, b1 = lin(ks[0], ks[1], input_size, hidden)
    w2, b2 = lin(ks[2], ks[3], hidden, hidden)
    w3, b3 = lin(ks[4], ks[5], hidden, output_size)
    return {"w1": w1, "b1": b1, "w2": w2, "b2": b2, "w3": w3, "b3": b3}


def dnn_reference(x, p):
    h1 = jnp.maximum(x @ p["w1"] + p["b1"], 0.0)
    h2 = jnp.maximum(h1 @ p["w2"] + p["b2"], 0.0)
    return h2 @ p["w3"] + p["b3"]


if __name__ == "__main__":
    key = jax.random.PRNGKey(0)
    k_x, k_p = jax.random.split(key)

    input_size = 8     # 'elec2' => 8 input features
    batch = 500        # not a tile multiple -> exercises ragged last block + grid of 4
    x = jax.random.normal(k_x, (batch, input_size), jnp.float32)
    params = init_params(k_p, input_size=input_size)

    # Parameters are packed ONCE (hoisted out of the per-call path) and reused.
    slab, meta = pack_params(params, dtype=jnp.float32)
    fwd = jax.jit(lambda xb, sl: dnn_forward(xb, sl, meta))

    out = jax.block_until_ready(fwd(x, slab))
    ref = dnn_reference(x, params)

    assert out.shape == (batch, 2), out.shape
    assert jnp.allclose(out, ref, atol=1e-4, rtol=1e-4), "mismatch vs reference"

    print("KERNEL_OK")
</pallas_src>

<mosaic_0001>
module attributes {stable_mosaic.version = 11 : i64} {
  func.func @kernel(%arg0: i32, %arg1: memref<128x8xf32, #tpu.memory_space<vmem>>, %arg2: memref<152x128xf32, #tpu.memory_space<vmem>>, %arg3: memref<8x128xf32, #tpu.memory_space<vmem>>) attributes {dimension_semantics = [#tpu.dimension_semantics<parallel>], iteration_bounds = array<i64: 4>, scalar_prefetch = 0 : i64, scratch_operands = 0 : i64, tpu.core_type = #tpu.core_type<tc>, window_params = [{transform_indices = @transform_0, window_bounds = array<i64: 128, 8>}, {pipeline_mode = #tpu.pipeline_mode<synchronous>, transform_indices = @transform_1, window_bounds = array<i64: 152, 128>}, {transform_indices = @transform_2, window_bounds = array<i64: 8, 128>}]} {
    %c0 = arith.constant 0 : index
    %c0_0 = arith.constant 0 : index
    %0 = vector.load %arg1[%c0, %c0_0] : memref<128x8xf32, #tpu.memory_space<vmem>>, vector<128x8xf32>
    %c0_1 = arith.constant 0 : index
    %c0_2 = arith.constant 0 : index
    %1 = vector.load %arg2[%c0_1, %c0_2] : memref<152x128xf32, #tpu.memory_space<vmem>>, vector<8x128xf32>
    %c8 = arith.constant 8 : index
    %c0_3 = arith.constant 0 : index
    %2 = vector.load %arg2[%c8, %c0_3] : memref<152x128xf32, #tpu.memory_space<vmem>>, vector<128x128xf32>
    %c136 = arith.constant 136 : index
    %c0_4 = arith.constant 0 : index
    %3 = vector.load %arg2[%c136, %c0_4] : memref<152x128xf32, #tpu.memory_space<vmem>>, vector<8x128xf32>
    %c144 = arith.constant 144 : index
    %c0_5 = arith.constant 0 : index
    %4 = vector.load %arg2[%c144, %c0_5] : memref<152x128xf32, #tpu.memory_space<vmem>>, vector<1x128xf32>
    %cst = arith.constant dense<0.000000e+00> : vector<128x128xf32>
    %5 = tpu.matmul %0, %1, %cst {dimension_numbers = #tpu.dot_dimension_numbers<[1], [0], [0], [1], [0, 0, 1, 1], [], []>} : vector<128x8xf32>, vector<8x128xf32>, vector<128x128xf32> -> vector<128x128xf32>
    %6 = vector.broadcast %4 : vector<1x128xf32> to vector<128x128xf32>
    %7 = arith.addf %5, %6 : vector<128x128xf32>
    %cst_6 = arith.constant 0.000000e+00 : f32
    %8 = vector.broadcast %cst_6 : f32 to vector<128x128xf32>
    %9 = arith.maximumf %7, %8 : vector<128x128xf32>
    %cst_7 = arith.constant dense<0.000000e+00> : vector<128x128xf32>
    %10 = tpu.matmul %9, %2, %cst_7 {dimension_numbers = #tpu.dot_dimension_numbers<[1], [0], [0], [1], [0, 0, 1, 1], [], []>} : vector<128x128xf32>, vector<128x128xf32>, vector<128x128xf32> -> vector<128x128xf32>
    %cst_8 = arith.constant 0.000000e+00 : f32
    %11 = vector.broadcast %cst_8 : f32 to vector<128x128xf32>
    %12 = arith.maximumf %10, %11 : vector<128x128xf32>
    %cst_9 = arith.constant dense<0.000000e+00> : vector<8x128xf32>
    %13 = tpu.matmul %3, %12, %cst_9 {dimension_numbers = #tpu.dot_dimension_numbers<[1], [1], [0], [0], [0, 0, 1, 0], [], []>} : vector<8x128xf32>, vector<128x128xf32>, vector<8x128xf32> -> vector<8x128xf32>
    %c0_10 = arith.constant 0 : index
    %c0_11 = arith.constant 0 : index
    %14 = vector.load %arg3[%c0_10, %c0_11] : memref<8x128xf32, #tpu.memory_space<vmem>>, vector<8x128xf32>
    tpu.vector_store %arg3[%c0_10, %c0_11], %13 {strides = array<i32>} : memref<8x128xf32, #tpu.memory_space<vmem>>, vector<8x128xf32>,
    return
  }
  func.func @transform_0(%arg0: i32) -> (i32, i32) {
    %c0_i32 = arith.constant 0 : i32
    %c0_i32_0 = arith.constant 0 : i32
    return %arg0, %c0_i32 : i32, i32
  }
  func.func @transform_1(%arg0: i32) -> (i32, i32) {
    %c0_i32 = arith.constant 0 : i32
    %c0_i32_0 = arith.constant 0 : i32
    %c0_i32_1 = arith.constant 0 : i32
    return %c0_i32, %c0_i32_0 : i32, i32
  }
  func.func @transform_2(%arg0: i32) -> (i32, i32) {
    %c0_i32 = arith.constant 0 : i32
    %c0_i32_0 = arith.constant 0 : i32
    return %c0_i32, %arg0 : i32, i32
  }
}

</mosaic_0001>

<llo_original>
// kernel: _lambda_.1
$region0: #{_lambda_.1}
  #allocation0 [shape = 'u32[]', space=smem, size = 0x4, offset = 0x4, fixed_abs, tag = 'smem constant byte address 0x4 - core index']
  #allocation1 [shape = 'u32[72,128]{1,0:T(1,128)}', space=vmem, size = 0x9000, scoped, tag = 'internal scratch']
  %s0 = inlined_call_operand.vmem [shape: f32[500,8], index: 0, kind: input, shape index: {}]
  %s1 = inlined_call_operand.vmem [shape: f32[152,128], index: 1, kind: input, shape index: {}]
  %s2 = inlined_call_operand.vmem [shape: f32[8,500], index: 2, kind: output, shape index: {}]
  %s3 = sld [smem:[#allocation0]]
  $region41: #{_lambda_.1} parent=0
    _
  %s5 = ssub.s32 1, %s3
  %s6 = scalar_select 0, %s5, %s3
  loop: start=0, step=1, limit=6
  $region2: #{_lambda_.1} parent=0 // loop_pre_header
    _
  $region3: #{_lambda_.1} parent=0 // loop_header
    %s8 = sphi 0, %s12
    %p9 = scmp.ge.s32.totalorder %s8, 6
    %s18 = sphi 0, %s20
    %s21 = sphi 0, %s18
    %s22 = sphi 0, %s21
    %s38 = sphi 0, %s22
    %s42 = sphi 0, %s42
    %s44 = sphi 0, %s42
    %s45 = sphi 0, %s44
    %s59 = sphi 0, %s45
    %s65 = sphi 0, %s67
    %s68 = sphi 0, %s65
    %s69 = sphi 0, %s68
    %s85 = sphi 0, %s69
  $region4: #{_lambda_.1} parent=0 // loop_header_branch
    %11 = sbr.rel (%p9) target = $region8
  $region5: #{_lambda_.1} parent=0 // loop_body
    %s13 = ssub.s32 %s8, 1
    %s14 = ssub.s32 %s8, 2
    %s15 = sadd.s32 %s8, 1
    %s16 = ssub.s32 %s8, %s15
    %p17 = scmp.eq.s32.totalorder %s16, 0
    %s19 = sadd.s32 %s18, 1
    %s20 = scalar_select %p17, %s18, %s19
    %p23 = pneg %p17
    %p24 = scmp.eq.s32.totalorder %s8, 3
    %p25 = por %p23, %p24
    %p26 = scmp.ne.s32.totalorder %s18, %s21
    %p27 = scmp.eq.s32.totalorder %s8, 0
    %p28 = por %p26, %p27
    %p29 = scmp.ne.s32.totalorder %s18, %s21
    %p30 = scmp.eq.s32.totalorder %s13, 3
    %p31 = por %p29, %p30
    %p32 = scmp.ne.s32.totalorder %s21, %s22
    %p33 = scmp.eq.s32.totalorder %s13, 0
    %p34 = por %p32, %p33
    %p35 = scmp.ne.s32.totalorder %s21, %s22
    %p36 = scmp.eq.s32.totalorder %s14, 3
    %p37 = por %p35, %p36
    %p39 = scmp.ne.s32.totalorder %s22, %s38
    %p40 = scmp.eq.s32.totalorder %s14, 0
    %p41 = por %p39, %p40
    %s43 = sadd.s32 %s42, 1
    %p46 = scmp.eq.s32.totalorder %s8, 3
    %p47 = scmp.ne.s32.totalorder %s42, %s44
    %p48 = scmp.eq.s32.totalorder %s8, 0
    %p49 = por %p47, %p48
    %p50 = scmp.ne.s32.totalorder %s42, %s44
    %p51 = scmp.eq.s32.totalorder %s13, 3
    %p52 = por %p50, %p51
    %p53 = scmp.ne.s32.totalorder %s44, %s45
    %p54 = scmp.eq.s32.totalorder %s13, 0
    %p55 = por %p53, %p54
    %p56 = scmp.ne.s32.totalorder %s44, %s45
    %p57 = scmp.eq.s32.totalorder %s14, 3
    %p58 = por %p56, %p57
    %p60 = scmp.ne.s32.totalorder %s45, %s59
    %p61 = scmp.eq.s32.totalorder %s14, 0
    %p62 = por %p60, %p61
    %s63 = ssub.s32 %s8, %s15
    %p64 = scmp.eq.s32.totalorder %s63, 0
    %s66 = sadd.s32 %s65, 1
    %s67 = scalar_select %p64, %s65, %s66
    %p70 = pneg %p64
    %p71 = scmp.eq.s32.totalorder %s8, 3
    %p72 = por %p70, %p71
    %p73 = scmp.ne.s32.totalorder %s65, %s68
    %p74 = scmp.eq.s32.totalorder %s8, 0
    %p75 = por %p73, %p74
    %p76 = scmp.ne.s32.totalorder %s65, %s68
    %p77 = scmp.eq.s32.totalorder %s13, 3
    %p78 = por %p76, %p77
    %p79 = scmp.ne.s32.totalorder %s68, %s69
    %p80 = scmp.eq.s32.totalorder %s13, 0
    %p81 = por %p79, %p80
    %p82 = scmp.ne.s32.totalorder %s68, %s69
    %p83 = scmp.eq.s32.totalorder %s14, 3
    %p84 = por %p82, %p83
    %p86 = scmp.ne.s32.totalorder %s69, %s85
    %p87 = scmp.eq.s32.totalorder %s14, 0
    %p88 = por %p86, %p87
    %p89 = scmp.le.s32.totalorder 1, %s8
    %p90 = scmp.lt.s32.totalorder %s8, 5
    %p91 = pnand %p89, %p90
    %p92 = pneg %p91
    // Predicated region
    $region9: #{_lambda_.1} parent=5 // pred_check
      _
    $region10: #{_lambda_.1} parent=5 // pred_check_branch
      %94 = sbr.rel (%p91) target = $region12
    $region11: #{_lambda_.1} parent=5 // pred_region
      %s95 = ssub.s32 %s8, 1
      // Predicated region
      $region13: #{_lambda_.1} parent=11 // pred_check
        %p96 = pneg %p55
      $region14: #{_lambda_.1} parent=11 // pred_check_branch
        %98 = sbr.rel (%p96) target = $region16
      $region15: #{_lambda_.1} parent=11 // pred_region
        _
      $region16: #{_lambda_.1} parent=11 // pred_fallthru
        _
    $region12: #{_lambda_.1} parent=5 // pred_fallthru
      _
    %p99 = scmp.lt.s32.totalorder %s8, 4
    // Predicated region
    $region17: #{_lambda_.1} parent=5 // pred_check
      %p100 = pneg %p99
    $region18: #{_lambda_.1} parent=5 // pred_check_branch
      %102 = sbr.rel (%p100) target = $region20
    $region19: #{_lambda_.1} parent=5 // pred_region
      // Predicated region
      $region21: #{_lambda_.1} parent=19 // pred_check
        %p103 = pneg %p28
      $region22: #{_lambda_.1} parent=19 // pred_check_branch
        %105 = sbr.rel (%p103) target = $region24
      $region23: #{_lambda_.1} parent=19 // pred_region
        %s106 = smul.u32 16, %s8
        %s107 = ssub.s32 63, %s106
        %p108 = scmp.lt.s32.totalorder %s107, 16
        %s109 = scalar_select %p108, %s107, 16
        %s110 = smul.u32 8, %s109
        %p111 = scmp.lt.s32.totalorder %s106, 62
        %s112 = scalar_select %p111, %s106, 62
        %s113 = smul.addr %s112, 8
        %s114 = scalar_lea.vmem %s0, %s113
        %s115 = smul.u32 16, %s8
        %s116 = ssub.s32 63, %s115
        %p117 = scmp.lt.s32.totalorder %s116, 16
        %s118 = scalar_select %p117, %s116, 16
        %s119 = smul.u32 8, %s118
      $region24: #{_lambda_.1} parent=19 // pred_fallthru
        _
    $region20: #{_lambda_.1} parent=5 // pred_fallthru
      _
    %p120 = scmp.le.s32.totalorder 1, %s8
    %p121 = scmp.lt.s32.totalorder %s8, 5
    %p122 = pnand %p120, %p121
    %p123 = pneg %p122
    // Predicated region
    $region25: #{_lambda_.1} parent=5 // pred_check
      _
    $region26: #{_lambda_.1} parent=5 // pred_check_branch
      %125 = sbr.rel (%p122) target = $region28
    $region27: #{_lambda_.1} parent=5 // pred_region
      %s126 = ssub.s32 %s8, 1
      %s127 = smul.u32 16, %s13
      %s128 = ssub.s32 63, %s127
      %p129 = scmp.lt.s32.totalorder %s128, 16
      %s130 = scalar_select %p129, %s128, 16
      %s131 = smul.u32 8, %s130
      %p132 = scmp.lt.s32.totalorder %s127, 62
      %s133 = scalar_select %p132, %s127, 62
      %s134 = smul.addr %s133, 8
      %s135 = scalar_lea.vmem %s0, %s134
      %p136 = pneg %p34
      %p137 = pneg %p31
      %p138 = pneg %p55
      %p139 = pneg %p52
      %p140 = pneg %p81
      %p141 = pneg %p78
      %p142 = scmp.lt.s32.totalorder %s13, 3
      %s143 = scalar_select %p142, %s13, 3
      %s144 = smul.addr %s143, 8
      %s145 = scalar_lea.vmem %s2, %s144
      %s146 = smul.u32 16, %s13
      %s147 = ssub.s32 63, %s146
      %p148 = scmp.lt.s32.totalorder %s147, 16
      %s149 = scalar_select %p148, %s147, 16
      %s150 = smul.u32 8, %s149
      %p151 = scmp.lt.s32.totalorder %s146, 62
      %s152 = scalar_select %p151, %s146, 62
      %s153 = smul.addr %s152, 8
      %s154 = scalar_lea.vmem %s0, %s153
      %s155 = smul.u32 16, %s13
      %s156 = ssub.s32 63, %s155
      %p157 = scmp.lt.s32.totalorder %s156, 16
      %s158 = scalar_select %p157, %s156, 16
      %s159 = smul.u32 8, %s158
      %p160 = scmp.lt.s32.totalorder %s13, 3
      %s161 = scalar_select %p160, %s13, 3
      %s162 = smul.addr %s161, 8
      %s163 = scalar_lea.vmem %s2, %s162
      %v164 = vld [vmem:[%s154] sm:$0xff]
      %v165 = vld [vmem:[%s154 + $0x8] sm:$0xff]
      %v166 = vld [vmem:[%s154 + $0x10] sm:$0xff]
      %v167 = vld [vmem:[%s154 + $0x18] sm:$0xff]
      %v168 = vld [vmem:[%s154 + $0x20] sm:$0xff]
      %v169 = vld [vmem:[%s154 + $0x28] sm:$0xff]
      %v170 = vld [vmem:[%s154 + $0x30] sm:$0xff]
      %v171 = vld [vmem:[%s154 + $0x38] sm:$0xff]
      %v172 = vld [vmem:[%s154 + $0x40] sm:$0xff]
      %v173 = vld [vmem:[%s154 + $0x48] sm:$0xff]
      %v174 = vld [vmem:[%s154 + $0x50] sm:$0xff]
      %v175 = vld [vmem:[%s154 + $0x58] sm:$0xff]
      %v176 = vld [vmem:[%s154 + $0x60] sm:$0xff]
      %v177 = vld [vmem:[%s154 + $0x68] sm:$0xff]
      %v178 = vld [vmem:[%s154 + $0x70] sm:$0xff]
      %v179 = vld [vmem:[%s154 + $0x78] sm:$0xff]
      %v180 = vld [vmem:[%s1] sm:$0xff]
      %v181 = vld [vmem:[%s1 + $0x8] sm:$0xff]
      %v182 = vld [vmem:[%s1 + $0x10] sm:$0xff]
      %v183 = vld [vmem:[%s1 + $0x18] sm:$0xff]
      %v184 = vld [vmem:[%s1 + $0x20] sm:$0xff]
      %v185 = vld [vmem:[%s1 + $0x28] sm:$0xff]
      %v186 = vld [vmem:[%s1 + $0x30] sm:$0xff]
      %v187 = vld [vmem:[%s1 + $0x38] sm:$0xff]
      %v188 = vld [vmem:[%s1 + $0x40] sm:$0xff]
      %v189 = vld [vmem:[%s1 + $0x48] sm:$0xff]
      %v190 = vld [vmem:[%s1 + $0x50] sm:$0xff]
      %v191 = vld [vmem:[%s1 + $0x58] sm:$0xff]
      %v192 = vld [vmem:[%s1 + $0x60] sm:$0xff]
      %v193 = vld [vmem:[%s1 + $0x68] sm:$0xff]
      %v194 = vld [vmem:[%s1 + $0x70] sm:$0xff]
      %v195 = vld [vmem:[%s1 + $0x78] sm:$0xff]
      %v196 = vld [vmem:[%s1 + $0x80] sm:$0xff]
      %v197 = vld [vmem:[%s1 + $0x88] sm:$0xff]
      %v198 = vld [vmem:[%s1 + $0x90] sm:$0x1]
      %v199 = vperm.slane %v198, 0
      %vm200 = vcmask 64512
      %v202 = vsel %vm200, %v164, 0
      %v205 = vsel %vm200, %v165, 0
      %v208 = vsel %vm200, %v166, 0
      %v211 = vsel %vm200, %v167, 0
      %v214 = vsel %vm200, %v168, 0
      %v217 = vsel %vm200, %v169, 0
      %v220 = vsel %vm200, %v170, 0
      %v223 = vsel %vm200, %v171, 0
      %v226 = vsel %vm200, %v172, 0
      %v229 = vsel %vm200, %v173, 0
      %v232 = vsel %vm200, %v174, 0
      %v235 = vsel %vm200, %v175, 0
      %v238 = vsel %vm200, %v176, 0
      %v241 = vsel %vm200, %v177, 0
      %v244 = vsel %vm200, %v178, 0
      %v247 = vsel %vm200, %v179, 0
      %249 = vmatpush.msra.mxu0 0.0
      %250 = vmatpush.msra.mxu0 0.0
      %251 = vmatpush.msra.mxu0 0.0
      %252 = vmatpush.msra.mxu0 0.0
      %253 = vmatpush.msra.mxu0 0.0
      %254 = vmatpush.msra.mxu0 0.0
      %255 = vmatpush.msra.mxu0 0.0
      %256 = vmatpush.msra.mxu0 0.0
      %257 = vmatpush.msra.mxu0 0.0
      %258 = vmatpush.msra.mxu0 0.0
      %259 = vmatpush.msra.mxu0 0.0
      %260 = vmatpush.msra.mxu0 0.0
      %261 = vmatpush.msra.mxu0 0.0
      %262 = vmatpush.msra.mxu0 0.0
      %263 = vmatpush.msra.mxu0 0.0
      %264 = vmatpush.msra.mxu0 %v180
      %265 = vmatmul.f32.gmra.mxu0 %v202
      %v266 = vpop.f32.mrf.mxu0
      %v267 = vadd.f32 %v199, %v266
      %268 = vmatmul.f32.gmra.mxu0 %v205
      %v269 = vpop.f32.mrf.mxu0
      %v270 = vadd.f32 %v199, %v269
      %271 = vmatmul.f32.gmra.mxu0 %v208
      %v272 = vpop.f32.mrf.mxu0
      %v273 = vadd.f32 %v199, %v272
      %274 = vmatmul.f32.gmra.mxu0 %v211
      %v275 = vpop.f32.mrf.mxu0
      %v276 = vadd.f32 %v199, %v275
      %277 = vmatmul.f32.gmra.mxu0 %v214
      %v278 = vpop.f32.mrf.mxu0
      %v279 = vadd.f32 %v199, %v278
      %280 = vmatmul.f32.gmra.mxu0 %v217
      %v281 = vpop.f32.mrf.mxu0
      %v282 = vadd.f32 %v199, %v281
      %283 = vmatmul.f32.gmra.mxu0 %v220
      %v284 = vpop.f32.mrf.mxu0
      %v285 = vadd.f32 %v199, %v284
      %286 = vmatmul.f32.gmra.mxu0 %v223
      %v287 = vpop.f32.mrf.mxu0
      %v288 = vadd.f32 %v199, %v287
      %289 = vmatmul.f32.gmra.mxu0 %v226
      %v290 = vpop.f32.mrf.mxu0
      %v291 = vadd.f32 %v199, %v290
      %292 = vmatmul.f32.gmra.mxu0 %v229
      %v293 = vpop.f32.mrf.mxu0
      %v294 = vadd.f32 %v199, %v293
      %295 = vmatmul.f32.gmra.mxu0 %v232
      %v296 = vpop.f32.mrf.mxu0
      %v297 = vadd.f32 %v199, %v296
      %298 = vmatmul.f32.gmra.mxu0 %v235
      %v299 = vpop.f32.mrf.mxu0
      %v300 = vadd.f32 %v199, %v299
      %301 = vmatmul.f32.gmra.mxu0 %v238
      %v302 = vpop.f32.mrf.mxu0
      %v303 = vadd.f32 %v199, %v302
      %304 = vmatmul.f32.gmra.mxu0 %v241
      %v305 = vpop.f32.mrf.mxu0
      %v306 = vadd.f32 %v199, %v305
      %307 = vmatmul.f32.gmra.mxu0 %v244
      %v308 = vpop.f32.mrf.mxu0
      %v309 = vadd.f32 %v199, %v308
      %310 = vmatmul.f32.gmra.mxu0 %v247
      %v311 = vpop.f32.mrf.mxu0
      %v312 = vadd.f32 %v199, %v311
      %313 = vdwg.mxu0
      %v314 = vmax.f32 %v267, 0.0
      %v315 = vmax.f32 %v270, 0.0
      %v316 = vmax.f32 %v273, 0.0
      %v317 = vmax.f32 %v276, 0.0
      %v318 = vmax.f32 %v279, 0.0
      %v319 = vmax.f32 %v282, 0.0
      %v320 = vmax.f32 %v285, 0.0
      %v321 = vmax.f32 %v288, 0.0
      %v322 = vmax.f32 %v291, 0.0
      %v323 = vmax.f32 %v294, 0.0
      %v324 = vmax.f32 %v297, 0.0
      %v325 = vmax.f32 %v300, 0.0
      %v326 = vmax.f32 %v303, 0.0
      %v327 = vmax.f32 %v306, 0.0
      %v328 = vmax.f32 %v309, 0.0
      %v329 = vmax.f32 %v312, 0.0
      %330 = vmatpush.msra.mxu0 %v196
      %331 = vmatpush.msra.mxu0 %v195
      %332 = vmatpush.msra.mxu0 %v194
      %333 = vmatpush.msra.mxu0 %v193
      %334 = vmatpush.msra.mxu0 %v192
      %335 = vmatpush.msra.mxu0 %v191
      %336 = vmatpush.msra.mxu0 %v190
      %337 = vmatpush.msra.mxu0 %v189
      %338 = vmatpush.msra.mxu0 %v188
      %339 = vmatpush.msra.mxu0 %v187
      %340 = vmatpush.msra.mxu0 %v186
      %341 = vmatpush.msra.mxu0 %v185
      %342 = vmatpush.msra.mxu0 %v184
      %343 = vmatpush.msra.mxu0 %v183
      %344 = vmatpush.msra.mxu0 %v182
      %345 = vmatpush.msra.mxu0 %v181
      %346 = vmatmul.f32.gmra.mxu0 %v314
      %v347 = vpop.f32.mrf.mxu0
      %v348 = vadd.f32 0.0, %v347
      %349 = vmatmul.f32.gmra.mxu0 %v315
      %v350 = vpop.f32.mrf.mxu0
      %v351 = vadd.f32 0.0, %v350
      %352 = vmatmul.f32.gmra.mxu0 %v316
      %v353 = vpop.f32.mrf.mxu0
      %v354 = vadd.f32 0.0, %v353
      %355 = vmatmul.f32.gmra.mxu0 %v317
      %v356 = vpop.f32.mrf.mxu0
      %v357 = vadd.f32 0.0, %v356
      %358 = vmatmul.f32.gmra.mxu0 %v318
      %v359 = vpop.f32.mrf.mxu0
      %v360 = vadd.f32 0.0, %v359
      %361 = vmatmul.f32.gmra.mxu0 %v319
      %v362 = vpop.f32.mrf.mxu0
      %v363 = vadd.f32 0.0, %v362
      %364 = vmatmul.f32.gmra.mxu0 %v320
      %v365 = vpop.f32.mrf.mxu0
      %v366 = vadd.f32 0.0, %v365
      %367 = vmatmul.f32.gmra.mxu0 %v321
      %v368 = vpop.f32.mrf.mxu0
      %v369 = vadd.f32 0.0, %v368
      %370 = vmatmul.f32.gmra.mxu0 %v322
      %v371 = vpop.f32.mrf.mxu0
      %v372 = vadd.f32 0.0, %v371
      %373 = vmatmul.f32.gmra.mxu0 %v323
      %v374 = vpop.f32.mrf.mxu0
      %v375 = vadd.f32 0.0, %v374
      %376 = vmatmul.f32.gmra.mxu0 %v324
      %v377 = vpop.f32.mrf.mxu0
      %v378 = vadd.f32 0.0, %v377
      %379 = vmatmul.f32.gmra.mxu0 %v325
      %v380 = vpop.f32.mrf.mxu0
      %v381 = vadd.f32 0.0, %v380
      %382 = vmatmul.f32.gmra.mxu0 %v326
      %v383 = vpop.f32.mrf.mxu0
      %v384 = vadd.f32 0.0, %v383
      %385 = vmatmul.f32.gmra.mxu0 %v327
      %v386 = vpop.f32.mrf.mxu0
      %v387 = vadd.f32 0.0, %v386
      %388 = vmatmul.f32.gmra.mxu0 %v328
      %v389 = vpop.f32.mrf.mxu0
      %v390 = vadd.f32 0.0, %v389
      %391 = vmatmul.f32.gmra.mxu0 %v329
      %v392 = vpop.f32.mrf.mxu0
      %v393 = vadd.f32 0.0, %v392
      %394 = vdwg.mxu0
      %v395 = vmax.f32 %v348, 0.0
      %v396 = vmax.f32 %v351, 0.0
      %v397 = vmax.f32 %v354, 0.0
      %v398 = vmax.f32 %v357, 0.0
      %v399 = vmax.f32 %v360, 0.0
      %v400 = vmax.f32 %v363, 0.0
      %v401 = vmax.f32 %v366, 0.0
      %v402 = vmax.f32 %v369, 0.0
      %v403 = vmax.f32 %v372, 0.0
      %v404 = vmax.f32 %v375, 0.0
      %v405 = vmax.f32 %v378, 0.0
      %v406 = vmax.f32 %v381, 0.0
      %v407 = vmax.f32 %v384, 0.0
      %v408 = vmax.f32 %v387, 0.0
      %v409 = vmax.f32 %v390, 0.0
      %v410 = vmax.f32 %v393, 0.0
      %411 = vmatpush.xpose.msra.mxu0 %v410
      %412 = vmatpush.xpose.msra.mxu0 %v409
      %413 = vmatpush.xpose.msra.mxu0 %v408
      %414 = vmatpush.xpose.msra.mxu0 %v407
      %415 = vmatpush.xpose.msra.mxu0 %v406
      %416 = vmatpush.xpose.msra.mxu0 %v405
      %417 = vmatpush.xpose.msra.mxu0 %v404
      %418 = vmatpush.xpose.msra.mxu0 %v403
      %419 = vmatpush.xpose.msra.mxu0 %v402
      %420 = vmatpush.xpose.msra.mxu0 %v401
      %421 = vmatpush.xpose.msra.mxu0 %v400
      %422 = vmatpush.xpose.msra.mxu0 %v399
      %423 = vmatpush.xpose.msra.mxu0 %v398
      %424 = vmatpush.xpose.msra.mxu0 %v397
      %425 = vmatpush.xpose.msra.mxu0 %v396
      %426 = vmatpush.xpose.msra.mxu0 %v395
      %427 = vmatmul.f32.gmra.mxu0 %v197
      %v428 = vpop.f32.mrf.mxu0
      %v429 = vadd.f32 0.0, %v428
      %430 = vdwg.mxu0
      %431 = vst [vmem:[%s163] sm:$0xff] %v429
      %p432 = scmp.lt.s32.totalorder %s13, 3
      %s433 = scalar_select %p432, %s13, 3
      %s434 = smul.addr %s433, 8
      %s435 = scalar_lea.vmem %s2, %s434
      // Predicated region
      $region29: #{_lambda_.1} parent=27 // pred_check
        %p436 = pneg %p78
      $region30: #{_lambda_.1} parent=27 // pred_check_branch
        %438 = sbr.rel (%p436) target = $region32
      $region31: #{_lambda_.1} parent=27 // pred_region
        _
      $region32: #{_lambda_.1} parent=27 // pred_fallthru
        _
    $region28: #{_lambda_.1} parent=5 // pred_fallthru
      _
    %p439 = scmp.le.s32.totalorder 2, %s8
    // Predicated region
    $region33: #{_lambda_.1} parent=5 // pred_check
      %p440 = pneg %p439
    $region34: #{_lambda_.1} parent=5 // pred_check_branch
      %442 = sbr.rel (%p440) target = $region36
    $region35: #{_lambda_.1} parent=5 // pred_region
      %s443 = ssub.s32 %s8, 2
      // Predicated region
      $region37: #{_lambda_.1} parent=35 // pred_check
        %p444 = pneg %p84
      $region38: #{_lambda_.1} parent=35 // pred_check_branch
        %446 = sbr.rel (%p444) target = $region40
      $region39: #{_lambda_.1} parent=35 // pred_region
        %p447 = scmp.lt.s32.totalorder %s14, 3
        %s448 = scalar_select %p447, %s14, 3
        %s449 = smul.addr %s448, 8
        %s450 = scalar_lea.vmem %s2, %s449
      $region40: #{_lambda_.1} parent=35 // pred_fallthru
        _
    $region36: #{_lambda_.1} parent=5 // pred_fallthru
      _
  $region6: #{_lambda_.1} parent=0 // loop_footer
    %s12 = sadd.s32 1, %s8
  $region7: #{_lambda_.1} parent=0 // loop_footer_branch
    %7 = sbr.rel target = $region3
  $region8: #{_lambda_.1} parent=0 // loop_exit
    _

</llo_original>
